<compile_context>
chip_gen: v5e
topology: v5e:2x2
jax: 0.10.0
libtpu: 0.0.40
codegen_flags: <defaults>
</compile_context>

<pallas_src>
import jax
import jax.numpy as jnp
from jax.experimental import pallas as pl
from jax.experimental.pallas import tpu as pltpu  # noqa: F401  (TPU backend)

# ----------------------------- problem sizes --------------------------------
B = 2       # batch
S = 8       # sequence length (image "height")
E = 32      # embedding dim   (image "width")
H = 32      # hidden units of the synthetic detector net
VOCAB = 40  # vocabulary of the (synthetic) character embedding


# ------------------------------- kernel --------------------------------------
def adapter_kernel(x_ref, w1_ref, p_ref, o_ref):
    # x_ref : [B, S*E]  flattened emulated image (unscale + mean-pool folded
    #                   into w1_ref at wrapper time)
    # w1_ref: [S*E, H]  tiled & scaled first-layer weight
    # p_ref : [3, H]    row 0 = folded b1, row 1 = w2 (as a row), row 2[0] = b2
    # o_ref : [B, 2]    (-logit, logit)
    x = x_ref[...]

    # Fused unscale + mean-pool + Linear(E->H): single K=S*E MXU contraction.
    h = jnp.dot(x, w1_ref[...], preferred_element_type=jnp.float32)
    h = jnp.maximum(h + p_ref[0:1, :], 0.0)                     # [B, H] ReLU

    # Linear(H->1) on the VPU/XLU: broadcast-multiply + lane reduce.
    w2_row = p_ref[1:2, :]                                      # [1, H]
    b2 = p_ref[2:3, 0:1]                                        # [1, 1]
    logit = jnp.sum(h * w2_row, axis=1, keepdims=True) + b2     # [B, 1]
    logit = logit.astype(o_ref.dtype)

    # torch.cat((-y, y), dim=1): write the two output columns directly
    # (no constants captured, no extra broadcast/multiply).
    o_ref[:, 0:1] = -logit
    o_ref[:, 1:2] = logit


# ------------------------------- wrapper --------------------------------------
def image_emulation_adapter_forward(x_img, w1, b1, w2, b2, emb_min, emb_max):
    """x_img: [B, 1, S, E] in [0, 1]  ->  [B, 2] logits (-y, y)."""
    assert x_img.ndim == 4 and x_img.shape[1] == 1
    batch, _, seq, emb = x_img.shape
    hid = w1.shape[1]

    # Fold __unscale into layer 1 (pure algebra, traced on-device — no float()):
    #   mean_s(x*scale + emb_min) @ w1 + b1
    #     == mean_s(x) @ (scale*w1) + (b1 + emb_min * sum_e w1[e, :])
    scale = emb_max - emb_min
    w1_f = scale * w1                                  # [E, H]
    b1_f = b1 + emb_min * jnp.sum(w1, axis=0)          # [H]

    # Fold the sequence mean-pool into the matmul:
    #   mean_s(x) @ w1_f == reshape(x, [B, S*E]) @ (tile(w1_f, (S, 1)) / S)
    w1_big = (jnp.tile(w1_f, (seq, 1)) / float(seq)).astype(jnp.float32)  # [S*E, H]
    x_flat = jnp.reshape(x_img, (batch, seq * emb)).astype(jnp.float32)   # [B, S*E]

    # Pack the remaining tiny parameters into one VMEM buffer (one DMA).
    params = jnp.zeros((3, hid), dtype=jnp.float32)
    params = params.at[0, :].set(b1_f)
    params = params.at[1, :].set(w2[:, 0])
    params = params.at[2, 0].set(b2[0])

    # TODO(synk): for realistic batches (B >> 2), add a batch grid with
    # dimension_semantics=("parallel",) and a lane-dense [2, B_tile] output.
    return pl.pallas_call(
        adapter_kernel,
        out_shape=jax.ShapeDtypeStruct((batch, 2), jnp.float32),
        in_specs=[
            pl.BlockSpec((batch, seq * emb), lambda: (0, 0)),
            pl.BlockSpec((seq * emb, hid), lambda: (0, 0)),
            pl.BlockSpec((3, hid), lambda: (0, 0)),
        ],
        out_specs=pl.BlockSpec((batch, 2), lambda: (0, 0)),
    )(x_flat, w1_big, params)


# ------------------------------- reference ------------------------------------
def reference_forward(x_img, w1, b1, w2, b2, emb_min, emb_max):
    x = jnp.squeeze(x_img, axis=1)
    x = x * (emb_max - emb_min) + emb_min
    pooled = jnp.mean(x, axis=1)
    h = jnp.maximum(pooled @ w1 + b1, 0.0)
    logit = h @ w2 + b2
    return jnp.concatenate([-logit, logit], axis=1)


# --------------------------------- main ----------------------------------------
if __name__ == "__main__":
    key = jax.random.PRNGKey(0)
    k_emb, k_w1, k_b1, k_w2, k_b2, k_x = jax.random.split(key, 6)

    # Synthetic character-embedding table (only used for its min/max, exactly
    # like the PyTorch adapter's __init__ does with model.embedding.weight).
    emb_table = jax.random.normal(k_emb, (VOCAB, E), dtype=jnp.float32) * 0.5
    emb_max = jnp.max(emb_table)
    emb_min = jnp.min(emb_table)

    # Deterministic synthetic detector-net parameters.
    w1 = jax.random.normal(k_w1, (E, H), dtype=jnp.float32) * 0.1
    b1 = jax.random.normal(k_b1, (H,), dtype=jnp.float32) * 0.01
    w2 = jax.random.normal(k_w2, (H, 1), dtype=jnp.float32) * 0.1
    b2 = jax.random.normal(k_b2, (1,), dtype=jnp.float32) * 0.01

    # Emulated-image input: [BATCH, 1, SEQ_LEN, EMB_DIM], values in [0, 1].
    x_img = jax.random.uniform(k_x, (B, 1, S, E), dtype=jnp.float32)

    out = image_emulation_adapter_forward(x_img, w1, b1, w2, b2, emb_min, emb_max)
    out = jax.block_until_ready(out)

    ref = reference_forward(x_img, w1, b1, w2, b2, emb_min, emb_max)
    assert out.shape == (B, 2)
    assert jnp.allclose(out, ref, atol=1e-4, rtol=1e-4), (out, ref)

    print("KERNEL_OK")
</pallas_src>

<mosaic_0001>
module attributes {stable_mosaic.version = 11 : i64} {
  func.func @adapter_kernel(%arg0: memref<2x256xf32, #tpu.memory_space<vmem>>, %arg1: memref<256x32xf32, #tpu.memory_space<vmem>>, %arg2: memref<3x32xf32, #tpu.memory_space<vmem>>, %arg3: memref<2x2xf32, #tpu.memory_space<vmem>>) attributes {dimension_semantics = [], scalar_prefetch = 0 : i64, scratch_operands = 0 : i64, tpu.core_type = #tpu.core_type<tc>} {
    %c0 = arith.constant 0 : index
    %c0_0 = arith.constant 0 : index
    %0 = vector.load %arg0[%c0, %c0_0] : memref<2x256xf32, #tpu.memory_space<vmem>>, vector<2x256xf32>
    %c0_1 = arith.constant 0 : index
    %c0_2 = arith.constant 0 : index
    %1 = vector.load %arg1[%c0_1, %c0_2] : memref<256x32xf32, #tpu.memory_space<vmem>>, vector<256x32xf32>
    %cst = arith.constant dense<0.000000e+00> : vector<2x32xf32>
    %2 = tpu.matmul %0, %1, %cst {dimension_numbers = #tpu.dot_dimension_numbers<[1], [0], [0], [1], [0, 0, 1, 1], [], []>} : vector<2x256xf32>, vector<256x32xf32>, vector<2x32xf32> -> vector<2x32xf32>
    %c0_3 = arith.constant 0 : index
    %c0_4 = arith.constant 0 : index
    %3 = vector.load %arg2[%c0_3, %c0_4] : memref<3x32xf32, #tpu.memory_space<vmem>>, vector<1x32xf32>
    %4 = vector.broadcast %3 : vector<1x32xf32> to vector<2x32xf32>
    %5 = arith.addf %2, %4 : vector<2x32xf32>
    %cst_5 = arith.constant 0.000000e+00 : f32
    %6 = vector.broadcast %cst_5 : f32 to vector<2x32xf32>
    %7 = arith.maximumf %5, %6 : vector<2x32xf32>
    %c1 = arith.constant 1 : index
    %c0_6 = arith.constant 0 : index
    %8 = vector.load %arg2[%c1, %c0_6] : memref<3x32xf32, #tpu.memory_space<vmem>>, vector<1x32xf32>
    %c2 = arith.constant 2 : index
    %c0_7 = arith.constant 0 : index
    %9 = vector.load %arg2[%c2, %c0_7] : memref<3x32xf32, #tpu.memory_space<vmem>>, vector<1x1xf32>
    %10 = vector.broadcast %8 : vector<1x32xf32> to vector<2x32xf32>
    %11 = arith.mulf %7, %10 : vector<2x32xf32>
    %cst_8 = arith.constant dense<0.000000e+00> : vector<2xf32>
    %12 = vector.multi_reduction <add>, %11, %cst_8 [1] : vector<2x32xf32> to vector<2xf32>
    %13 = vector.shape_cast %12 : vector<2xf32> to vector<2x1xf32>
    %14 = vector.broadcast %9 : vector<1x1xf32> to vector<2x1xf32>
    %15 = arith.addf %13, %14 : vector<2x1xf32>
    %cst_9 = arith.constant 0.000000e+00 : f32
    %16 = vector.broadcast %cst_9 : f32 to vector<2x1xf32>
    %17 = arith.subf %16, %15 : vector<2x1xf32>
    %c0_10 = arith.constant 0 : index
    %c0_11 = arith.constant 0 : index
    %18 = vector.load %arg3[%c0_10, %c0_11] : memref<2x2xf32, #tpu.memory_space<vmem>>, vector<2x1xf32>
    tpu.vector_store %arg3[%c0_10, %c0_11], %17 {strides = array<i32>} : memref<2x2xf32, #tpu.memory_space<vmem>>, vector<2x1xf32>,
    %c0_12 = arith.constant 0 : index
    %c1_13 = arith.constant 1 : index
    %19 = vector.load %arg3[%c0_12, %c1_13] : memref<2x2xf32, #tpu.memory_space<vmem>>, vector<2x1xf32>
    tpu.vector_store %arg3[%c0_12, %c1_13], %15 {strides = array<i32>} : memref<2x2xf32, #tpu.memory_space<vmem>>, vector<2x1xf32>,
    return
  }
}

</mosaic_0001>

<llo_original>
// kernel: tpu_custom_call.1
$region0: #{tpu_custom_call.1}
  #allocation0 [shape = 'u32[]', space=smem, size = 0x4, offset = 0x4, fixed_abs, tag = 'smem constant byte address 0x4 - core index']
  #allocation1 [shape = 'u32[72,128]{1,0:T(1,128)}', space=vmem, size = 0x9000, scoped, tag = 'internal scratch']
  %s0 = inlined_call_operand.vmem [shape: f32[2,256], index: 0, kind: input, shape index: {}]
  %s1 = inlined_call_operand.vmem [shape: f32[256,32], index: 1, kind: input, shape index: {}]
  %s2 = inlined_call_operand.vmem [shape: f32[3,32], index: 2, kind: input, shape index: {}]
  %s3 = inlined_call_operand.hbm [shape: f32[2,2], index: 3, kind: output, shape index: {}]
  %s4 = sld [smem:[#allocation0]]
  $region22: #{tpu_custom_call.1} parent=0
    _
  %s6 = ssub.s32 1, %s4
  %s7 = scalar_select 0, %s6, %s4
  $region1: #{tpu_custom_call.1} parent=0
    #allocation2 [shape = 'u8[1024]{0}', space=vmem, size = 0x400, scoped, tag = 'output window, operand 0, single buffered']
    #allocation3 [shape = 's32[1]{0}', space=sflag, size = 0x4, scoped, tag = 'scoped memory for tpu_custom_call.1']
    %8 = vsyncpa [#allocation3], 0
    // Predicated region
    $region2: #{tpu_custom_call.1} parent=1 // pred_check
      _
    $region3: #{tpu_custom_call.1} parent=1 // pred_check_branch
      %10 = sbr.rel (0) target = $region5
    $region4: #{tpu_custom_call.1} parent=1 // pred_region
      _
    $region5: #{tpu_custom_call.1} parent=1 // pred_fallthru
      _
    // Predicated region
    $region6: #{tpu_custom_call.1} parent=1 // pred_check
      _
    $region7: #{tpu_custom_call.1} parent=1 // pred_check_branch
      %12 = sbr.rel (0) target = $region9
    $region8: #{tpu_custom_call.1} parent=1 // pred_region
      _
    $region9: #{tpu_custom_call.1} parent=1 // pred_fallthru
      _
    // Predicated region
    $region10: #{tpu_custom_call.1} parent=1 // pred_check
      _
    $region11: #{tpu_custom_call.1} parent=1 // pred_check_branch
      %14 = sbr.rel (0) target = $region13
    $region12: #{tpu_custom_call.1} parent=1 // pred_region
      _
    $region13: #{tpu_custom_call.1} parent=1 // pred_fallthru
      _
    %v15 = vld [vmem:[%s0] sm:$0xf]
    %v16 = vld [vmem:[%s1] sm:$0xff]
    %v17 = vld [vmem:[%s1 + $0x8] sm:$0xff]
    %v18 = vld [vmem:[%s1 + $0x10] sm:$0xff]
    %v19 = vld [vmem:[%s1 + $0x18] sm:$0xff]
    %v20 = vld [vmem:[%s1 + $0x20] sm:$0xff]
    %v21 = vld [vmem:[%s1 + $0x28] sm:$0xff]
    %v22 = vld [vmem:[%s1 + $0x30] sm:$0xff]
    %v23 = vld [vmem:[%s1 + $0x38] sm:$0xff]
    %v24 = vld [vmem:[%s1 + $0x40] sm:$0xff]
    %v25 = vld [vmem:[%s1 + $0x48] sm:$0xff]
    %v26 = vld [vmem:[%s1 + $0x50] sm:$0xff]
    %v27 = vld [vmem:[%s1 + $0x58] sm:$0xff]
    %v28 = vld [vmem:[%s1 + $0x60] sm:$0xff]
    %v29 = vld [vmem:[%s1 + $0x68] sm:$0xff]
    %v30 = vld [vmem:[%s1 + $0x70] sm:$0xff]
    %v31 = vld [vmem:[%s1 + $0x78] sm:$0xff]
    %v32 = vld [vmem:[%s1 + $0x80] sm:$0xff]
    %v33 = vld [vmem:[%s1 + $0x88] sm:$0xff]
    %v34 = vld [vmem:[%s1 + $0x90] sm:$0xff]
    %v35 = vld [vmem:[%s1 + $0x98] sm:$0xff]
    %v36 = vld [vmem:[%s1 + $0xa0] sm:$0xff]
    %v37 = vld [vmem:[%s1 + $0xa8] sm:$0xff]
    %v38 = vld [vmem:[%s1 + $0xb0] sm:$0xff]
    %v39 = vld [vmem:[%s1 + $0xb8] sm:$0xff]
    %v40 = vld [vmem:[%s1 + $0xc0] sm:$0xff]
    %v41 = vld [vmem:[%s1 + $0xc8] sm:$0xff]
    %v42 = vld [vmem:[%s1 + $0xd0] sm:$0xff]
    %v43 = vld [vmem:[%s1 + $0xd8] sm:$0xff]
    %v44 = vld [vmem:[%s1 + $0xe0] sm:$0xff]
    %v45 = vld [vmem:[%s1 + $0xe8] sm:$0xff]
    %v46 = vld [vmem:[%s1 + $0xf0] sm:$0xff]
    %v47 = vld [vmem:[%s1 + $0xf8] sm:$0xff]
    %v48 = vld [vmem:[%s2] sm:$0x1]
    %v49 = vperm.slane %v48, 0
    %51 = vst [vmem:[#allocation1] ss:$4 sm:$0xff] %v15
    %v52 = vld.sshfl [vmem:[#allocation1] sm:$0xff pattern:$0x73625140]
    %v53 = vld.sshfl [vmem:[#allocation1 + $0x8] sm:$0xff pattern:$0x73625140]
    %56 = vmatpush.msra.mxu0 %v31
    %57 = vmatpush.msra.mxu0 %v30
    %58 = vmatpush.msra.mxu0 %v29
    %59 = vmatpush.msra.mxu0 %v28
    %60 = vmatpush.msra.mxu0 %v27
    %61 = vmatpush.msra.mxu0 %v26
    %62 = vmatpush.msra.mxu0 %v25
    %63 = vmatpush.msra.mxu0 %v24
    %64 = vmatpush.msra.mxu0 %v23
    %65 = vmatpush.msra.mxu0 %v22
    %66 = vmatpush.msra.mxu0 %v21
    %67 = vmatpush.msra.mxu0 %v20
    %68 = vmatpush.msra.mxu0 %v19
    %69 = vmatpush.msra.mxu0 %v18
    %70 = vmatpush.msra.mxu0 %v17
    %71 = vmatpush.msra.mxu0 %v16
    %72 = vmatmul.f32.gmra.mxu0 %v52
    %v73 = vpop.f32.mrf.mxu0
    %v74 = vadd.f32 %v49, %v73
    %75 = vdwg.mxu0
    %76 = vmatpush.msra.mxu0 %v47
    %77 = vmatpush.msra.mxu0 %v46
    %78 = vmatpush.msra.mxu0 %v45
    %79 = vmatpush.msra.mxu0 %v44
    %80 = vmatpush.msra.mxu0 %v43
    %81 = vmatpush.msra.mxu0 %v42
    %82 = vmatpush.msra.mxu0 %v41
    %83 = vmatpush.msra.mxu0 %v40
    %84 = vmatpush.msra.mxu0 %v39
    %85 = vmatpush.msra.mxu0 %v38
    %86 = vmatpush.msra.mxu0 %v37
    %87 = vmatpush.msra.mxu0 %v36
    %88 = vmatpush.msra.mxu0 %v35
    %89 = vmatpush.msra.mxu0 %v34
    %90 = vmatpush.msra.mxu0 %v33
    %91 = vmatpush.msra.mxu0 %v32
    %92 = vmatmul.f32.gmra.mxu0 %v53
    %v93 = vpop.f32.mrf.mxu0
    %v94 = vadd.f32 %v74, %v93
    %95 = vdwg.mxu0
    %v96 = vmax.f32 %v94, 0.0
    %v97 = vld [vmem:[%s2 + $0x1] sm:$0x1]
    %v98 = vld [vmem:[%s2 + $0x2] sm:$0x1]
    %v99 = vperm.slane %v97, 0
    %v100 = vmul.f32 %v96, %v99
    %vm101 = vcmask 254976
    %v102 = vsel %vm101, %v100, 0.0
    %103 = vadd.xlane.f32.xlu0 %v102
    %v104 = vpop.xlane.xlu0 %103
    %v105 = vperm.slane %v98, 0
    %v106 = vadd.f32 %v104, %v105
    %v107 = vsub.f32 0.0, %v106
    %vm108 = vcmask 1024
    %109 = vst.msk [vmem:[#allocation2] sm:$0x3] %vm108, %v107
    %111 = vrot.lane.b32.xlu0 %v106, 1
    %v112 = vpop.permute.xlu0 %111
    %vm114 = vcmask 9224
    %115 = vst.msk [vmem:[#allocation2] sm:$0x3] %vm114, %v112
    // Predicated region
    $region14: #{tpu_custom_call.1} parent=1 // pred_check
      _
    $region15: #{tpu_custom_call.1} parent=1 // pred_check_branch
      %117 = sbr.rel (0) target = $region17
    $region16: #{tpu_custom_call.1} parent=1 // pred_region
      %119 = vsyncadd [#allocation3], 0
      %s121 = sshll.u32 [#allocation2], 4
      %s122 = int_to_ptr.vmem [resolvable:$true] %s121
      %s123 = sshll.u32 %s3, 4
      %s124 = int_to_ptr.hbm [resolvable:$true] %s123
      %126 = dma.vmem_to_hbm [thread:$0]  %s122, 32, %s124, [#allocation3]
    $region17: #{tpu_custom_call.1} parent=1 // pred_fallthru
      _
    // Predicated region
    $region18: #{tpu_custom_call.1} parent=1 // pred_check
      _
    $region19: #{tpu_custom_call.1} parent=1 // pred_check_branch
      %128 = sbr.rel (0) target = $region21
    $region20: #{tpu_custom_call.1} parent=1 // pred_region
      %130 = dma.done [#allocation3], 32
    $region21: #{tpu_custom_call.1} parent=1 // pred_fallthru
      _
    %131 = vsyncpa [#allocation3], 1

</llo_original>
